<compile_context>
chip_gen: v7x
topology: tpu7x:2x2x1
jax: 0.10.0
libtpu: 0.0.40
codegen_flags: <defaults>
</compile_context>

<pallas_src>
import math

import jax
import jax.numpy as jnp
from jax.experimental import pallas as pl
from jax.experimental.pallas import tpu as pltpu

_TARGET_BLOCK_BYTES = 4 * 1024 * 1024   # ~4 MiB per block for any dtype
_VMEM_LIMIT_BYTES = 48 * 1024 * 1024    # < 64 MiB (v7x physical), ample on v5e/v6e


def _pcmax_kernel(x_ref, o_ref):
    # Elementwise add-one on the whole VMEM tile (pure VPU work).
    o_ref[...] = x_ref[...] + jnp.asarray(1, dtype=o_ref.dtype)


def _round_up(x: int, m: int) -> int:
    return ((x + m - 1) // m) * m


def _choose_lane(total: int):
    """Widest lane width that divides `total` (no pad); else pad a <1-row tail."""
    for lane in (1024, 512, 256, 128):
        if total % lane == 0:
            return lane, False
    return 1024, True


def _choose_tile_r(rows: int, lane: int, itemsize: int) -> int:
    """Rows per grid step: ~4 MiB blocks, sublane-packed, >=4 steps when possible."""
    target = max(8, _TARGET_BLOCK_BYTES // (lane * itemsize))
    sub = max(8, 32 // itemsize)          # sublane packing: 8 f32, 16 bf16, 32 int8/fp8
    if rows <= sub:
        return rows                       # single full-dim block (always legal)
    if rows >= 2 * target:
        return target                     # big input: full-size blocks, many steps
    # Small/mid input: aim for >=4 grid steps so both v7x TCs get work,
    # while keeping the block a multiple of the sublane packing.
    tile = _round_up(pl.cdiv(rows, 4), sub)
    return min(tile, rows)


def pcmax(input_data: jax.Array, dim: int) -> jax.Array:
    """Pallas equivalent of PCMaxLayer.forward(input_data, dim) == input_data + 1.

    `dim` is accepted for API parity but (as in the PyTorch forward) unused.
    """
    del dim  # only meaningful for the ONNX symbolic, not the forward compute
    orig_shape = input_data.shape
    dtype = input_data.dtype
    total = math.prod(orig_shape)
    if total == 0:
        return input_data  # empty tensor: nothing to add to

    itemsize = jnp.dtype(dtype).itemsize
    lane, need_pad = _choose_lane(total)

    flat = input_data.reshape(total)
    if need_pad:
        padded_total = _round_up(total, lane)
        flat = jnp.pad(flat, (0, padded_total - total))
    else:
        padded_total = total

    rows = padded_total // lane
    tile_r = _choose_tile_r(rows, lane, itemsize)
    grid = (pl.cdiv(rows, tile_r),)       # ragged last block is masked by Pallas

    x2d = flat.reshape(rows, lane)

    out2d = pl.pallas_call(
        _pcmax_kernel,
        out_shape=jax.ShapeDtypeStruct((rows, lane), dtype),
        grid=grid,
        in_specs=[pl.BlockSpec((tile_r, lane), lambda i: (i, 0))],
        out_specs=pl.BlockSpec((tile_r, lane), lambda i: (i, 0)),
        cost_estimate=pl.CostEstimate(
            flops=padded_total,
            bytes_accessed=2 * padded_total * itemsize,
            transcendentals=0,
        ),
        compiler_params=pltpu.CompilerParams(
            dimension_semantics=("parallel",),
            vmem_limit_bytes=_VMEM_LIMIT_BYTES,
        ),
    )(x2d)

    if need_pad:
        return out2d.reshape(padded_total)[:total].reshape(orig_shape)
    return out2d.reshape(orig_shape)


if __name__ == "__main__":
    key = jax.random.PRNGKey(0)
    # Small NCHW input consistent with a conv-style module interface.
    x = jax.random.normal(key, (2, 4, 16, 16), dtype=jnp.float32)
    dim = 1  # channel dim, as a torch user would pass; unused by forward

    # Reference (forward is exactly x + 1).
    ref = x + 1.0

    out = pcmax(x, dim)
    out = jax.block_until_ready(out)

    assert out.shape == x.shape and out.dtype == x.dtype
    assert jnp.allclose(out, ref), "mismatch vs reference x + 1"

    print("KERNEL_OK")
</pallas_src>

<mosaic_0001>
module attributes {stable_mosaic.version = 11 : i64} {
  func.func @_pcmax_kernel(%arg0: i32, %arg1: memref<2x1024xf32, #tpu.memory_space<vmem>>, %arg2: memref<2x1024xf32, #tpu.memory_space<vmem>>) attributes {dimension_semantics = [#tpu.dimension_semantics<parallel>], iteration_bounds = array<i64: 1>, scalar_prefetch = 0 : i64, scratch_operands = 0 : i64, tpu.core_type = #tpu.core_type<tc>, window_params = [{transform_indices = @transform_0, window_bounds = array<i64: 2, 1024>}, {transform_indices = @transform_1, window_bounds = array<i64: 2, 1024>}]} {
    %c0 = arith.constant 0 : index
    %c0_0 = arith.constant 0 : index
    %0 = vector.load %arg1[%c0, %c0_0] : memref<2x1024xf32, #tpu.memory_space<vmem>>, vector<2x1024xf32>
    %cst = arith.constant 1.000000e+00 : f32
    %1 = vector.broadcast %cst : f32 to vector<2x1024xf32>
    %2 = arith.addf %0, %1 : vector<2x1024xf32>
    %c0_1 = arith.constant 0 : index
    %c0_2 = arith.constant 0 : index
    %3 = vector.load %arg2[%c0_1, %c0_2] : memref<2x1024xf32, #tpu.memory_space<vmem>>, vector<2x1024xf32>
    tpu.vector_store %arg2[%c0_1, %c0_2], %2 {strides = array<i32>} : memref<2x1024xf32, #tpu.memory_space<vmem>>, vector<2x1024xf32>,
    return
  }
  func.func @transform_0(%arg0: i32) -> (i32, i32) {
    %c0_i32 = arith.constant 0 : i32
    %c0_i32_0 = arith.constant 0 : i32
    return %arg0, %c0_i32 : i32, i32
  }
  func.func @transform_1(%arg0: i32) -> (i32, i32) {
    %c0_i32 = arith.constant 0 : i32
    %c0_i32_0 = arith.constant 0 : i32
    return %arg0, %c0_i32 : i32, i32
  }
}

</mosaic_0001>

<llo_original>
// kernel: tpu_custom_call.1
$region0: #{tpu_custom_call.1}
  #allocation0 [shape = 'u32[]', space=smem, size = 0x4, offset = 0x4, fixed_abs, tag = 'smem constant byte address 0x4 - core index']
  #allocation1 [shape = 'u32[144,128]{1,0:T(1,128)}', space=vmem, size = 0x12000, scoped, tag = 'internal scratch']
  %s0 = inlined_call_operand.hbm [shape: f32[2,1024], index: 0, kind: input, shape index: {}]
  %s1 = inlined_call_operand.hbm [shape: f32[2,1024], index: 1, kind: output, shape index: {}]
  %s2 = sld [smem:[#allocation0]]
  $region18: #{tpu_custom_call.1} parent=0
    _
  %s4 = ssub.s32 1, %s2
  %s5 = scalar_select 0, %s4, %s2
  $region1: #{tpu_custom_call.1} parent=0
    #allocation2 [shape = 'u8[8192]{0}', space=vmem, size = 0x2000, scoped, tag = 'input window, operand 0, single buffered']
    #allocation3 [shape = 's32[1]{0}', space=sflag, size = 0x4, scoped, tag = 'scoped memory for tpu_custom_call.1']
    #allocation4 [shape = 's32[1]{0}', space=sflag, size = 0x4, scoped, tag = 'scoped memory for tpu_custom_call.1']
    #allocation5 [shape = 'u8[8192]{0}', space=vmem, size = 0x2000, scoped, tag = 'output window, operand 0, single buffered']
    %6 = vsyncpa [#allocation3], 0
    %7 = vsyncpa [#allocation4], 0
    // Predicated region
    $region2: #{tpu_custom_call.1} parent=1 // pred_check
      _
    $region3: #{tpu_custom_call.1} parent=1 // pred_check_branch
      %9 = sbr.rel (0) target = $region5
    $region4: #{tpu_custom_call.1} parent=1 // pred_region
      %s11 = ssub.s32 256, 256
      %12 = vsyncadd [#allocation3], %s11
      %s14 = sshll.u32 [#allocation2], 4
      %s15 = int_to_ptr.vmem [resolvable:$true] %s14
      %17 = dma.hbm_to_vmem [thread:$0]  %s0, 256, %s15, [#allocation3]
    $region5: #{tpu_custom_call.1} parent=1 // pred_fallthru
      _
    // Predicated region
    $region6: #{tpu_custom_call.1} parent=1 // pred_check
      _
    $region7: #{tpu_custom_call.1} parent=1 // pred_check_branch
      %19 = sbr.rel (0) target = $region9
    $region8: #{tpu_custom_call.1} parent=1 // pred_region
      %20 = dma.done [#allocation3], 256
    $region9: #{tpu_custom_call.1} parent=1 // pred_fallthru
      _
    %v21 = vld [vmem:[#allocation2] sm:$0xff]
    %v22 = vld [vmem:[#allocation2 + $0x8] sm:$0xff]
    %v23 = vadd.f32 %v21, 1.0
    %v24 = vadd.f32 %v22, 1.0
    %25 = vst [vmem:[#allocation5] sm:$0xff] %v23
    %26 = vst [vmem:[#allocation5 + $0x8] sm:$0xff] %v24
    // Predicated region
    $region10: #{tpu_custom_call.1} parent=1 // pred_check
      _
    $region11: #{tpu_custom_call.1} parent=1 // pred_check_branch
      %28 = sbr.rel (0) target = $region13
    $region12: #{tpu_custom_call.1} parent=1 // pred_region
      %s30 = ssub.s32 256, 256
      %31 = vsyncadd [#allocation4], %s30
      %s33 = sshll.u32 [#allocation5], 4
      %s34 = int_to_ptr.vmem [resolvable:$true] %s33
      %36 = dma.vmem_to_hbm [thread:$0]  %s34, 256, %s1, [#allocation4]
    $region13: #{tpu_custom_call.1} parent=1 // pred_fallthru
      _
    // Predicated region
    $region14: #{tpu_custom_call.1} parent=1 // pred_check
      _
    $region15: #{tpu_custom_call.1} parent=1 // pred_check_branch
      %38 = sbr.rel (0) target = $region17
    $region16: #{tpu_custom_call.1} parent=1 // pred_region
      %39 = dma.done [#allocation4], 256
    $region17: #{tpu_custom_call.1} parent=1 // pred_fallthru
      _
    %40 = vsyncpa [#allocation3], 1
    %41 = vsyncpa [#allocation4], 1

</llo_original>
